<compile_context>
chip_gen: v7x
topology: tpu7x:2x2x1
jax: 0.10.0
libtpu: 0.0.40
codegen_flags: <defaults>
</compile_context>

<pallas_src>
import jax
import jax.numpy as jnp
from jax.experimental import pallas as pl
from jax.experimental.pallas import tpu as pltpu

BN_EPS = 1e-5
LANE = 128
SUBLANE = 8


def _round_up(n, m):
    return ((n + m - 1) // m) * m


def head_kernel(x_ref, scale_ref, shift_ref, w_ref, b_ref, o_ref):
    # Fused BN affine (precomputed scale/shift) + ReLU, in f32 on the VPU.
    x = x_ref[...].astype(jnp.float32)                       # (TB, Din_p)
    h = jnp.maximum(x * scale_ref[...] + shift_ref[...], 0.0)
    # Linear on the MXU: bf16 operands, f32 accumulation.
    y = jnp.dot(h.astype(jnp.bfloat16), w_ref[...],
                preferred_element_type=jnp.float32)          # (TB, Dout_p)
    o_ref[...] = (y + b_ref[...]).astype(o_ref.dtype)


def head_forward(x, gamma, beta, weight, bias, *, block_b=512):
    """x: (B, d_in) f32.  weight: (d_in, d_out) == torch weight.T.  Returns (B, d_out)."""
    B, d_in = x.shape
    d_out = weight.shape[1]

    # ---- BatchNorm1d training-mode statistics, hoisted out of the kernel ----
    x32 = x.astype(jnp.float32)
    mean = jnp.mean(x32, axis=0)
    var = jnp.mean((x32 - mean) ** 2, axis=0)               # biased variance
    inv_std = jax.lax.rsqrt(var + BN_EPS)
    scale = gamma.astype(jnp.float32) * inv_std              # (d_in,)
    shift = beta.astype(jnp.float32) - mean * scale          # (d_in,)

    # ---- lane-dense padding: features -> multiple of 128, batch -> TB ------
    d_in_p = _round_up(d_in, LANE)
    d_out_p = _round_up(d_out, LANE)
    tb = min(block_b, _round_up(B, SUBLANE))
    b_p = _round_up(B, tb)

    xp = jnp.zeros((b_p, d_in_p), jnp.float32).at[:B, :d_in].set(x32)
    scale_p = jnp.zeros((1, d_in_p), jnp.float32).at[0, :d_in].set(scale)
    shift_p = jnp.zeros((1, d_in_p), jnp.float32).at[0, :d_in].set(shift)
    wp = jnp.zeros((d_in_p, d_out_p), jnp.bfloat16).at[:d_in, :d_out].set(
        weight.astype(jnp.bfloat16))
    bp = jnp.zeros((1, d_out_p), jnp.float32).at[0, :d_out].set(
        bias.astype(jnp.float32))

    out = pl.pallas_call(
        head_kernel,
        out_shape=jax.ShapeDtypeStruct((b_p, d_out_p), x.dtype),
        grid=(b_p // tb,),
        in_specs=[
            pl.BlockSpec((tb, d_in_p), lambda i: (i, 0)),        # x tile (streamed)
            pl.BlockSpec((1, d_in_p), lambda i: (0, 0)),         # scale (resident)
            pl.BlockSpec((1, d_in_p), lambda i: (0, 0)),         # shift (resident)
            pl.BlockSpec((d_in_p, d_out_p), lambda i: (0, 0)),   # W (resident)
            pl.BlockSpec((1, d_out_p), lambda i: (0, 0)),        # bias (resident)
        ],
        out_specs=pl.BlockSpec((tb, d_out_p), lambda i: (i, 0)),
        compiler_params=pltpu.CompilerParams(
            dimension_semantics=("parallel",)),
    )(xp, scale_p, shift_p, wp, bp)

    return out[:B, :d_out]


def reference(x, gamma, beta, weight, bias):
    mean = jnp.mean(x, axis=0, keepdims=True)
    var = jnp.mean((x - mean) ** 2, axis=0, keepdims=True)
    xn = (x - mean) / jnp.sqrt(var + BN_EPS) * gamma + beta
    h = jnp.maximum(xn, 0.0)
    return h @ weight + bias


if __name__ == "__main__":
    B, d_in, d_out = 16, 32, 8

    key = jax.random.PRNGKey(0)
    kx, kw, kb = jax.random.split(key, 3)

    x = jax.random.normal(kx, (B, d_in), dtype=jnp.float32)

    # nn.Linear init U(-1/sqrt(fan_in), 1/sqrt(fan_in)); BN gamma=1, beta=0.
    lim = 1.0 / jnp.sqrt(jnp.float32(d_in))
    weight = jax.random.uniform(kw, (d_in, d_out), jnp.float32, -lim, lim)
    bias = jax.random.uniform(kb, (d_out,), jnp.float32, -lim, lim)
    gamma = jnp.ones((d_in,), jnp.float32)
    beta = jnp.zeros((d_in,), jnp.float32)

    out = head_forward(x, gamma, beta, weight, bias)
    out = jax.block_until_ready(out)

    ref = reference(x, gamma, beta, weight, bias)
    assert out.shape == (B, d_out)
    # Loose-ish tolerance: the kernel uses bf16 MXU operands (f32 accumulation).
    assert jnp.allclose(out, ref, atol=3e-2, rtol=3e-2)

    print("KERNEL_OK")
</pallas_src>

<mosaic_0001>
module attributes {stable_mosaic.version = 11 : i64} {
  func.func @head_kernel(%arg0: i32, %arg1: memref<16x128xf32, #tpu.memory_space<vmem>>, %arg2: memref<1x128xf32, #tpu.memory_space<vmem>>, %arg3: memref<1x128xf32, #tpu.memory_space<vmem>>, %arg4: memref<128x128xbf16, #tpu.memory_space<vmem>>, %arg5: memref<1x128xf32, #tpu.memory_space<vmem>>, %arg6: memref<16x128xf32, #tpu.memory_space<vmem>>) attributes {dimension_semantics = [#tpu.dimension_semantics<parallel>], iteration_bounds = array<i64: 1>, scalar_prefetch = 0 : i64, scratch_operands = 0 : i64, tpu.core_type = #tpu.core_type<tc>, window_params = [{transform_indices = @transform_0, window_bounds = array<i64: 16, 128>}, {pipeline_mode = #tpu.pipeline_mode<synchronous>, transform_indices = @transform_1, window_bounds = array<i64: 1, 128>}, {pipeline_mode = #tpu.pipeline_mode<synchronous>, transform_indices = @transform_2, window_bounds = array<i64: 1, 128>}, {pipeline_mode = #tpu.pipeline_mode<synchronous>, transform_indices = @transform_3, window_bounds = array<i64: 128, 128>}, {pipeline_mode = #tpu.pipeline_mode<synchronous>, transform_indices = @transform_4, window_bounds = array<i64: 1, 128>}, {transform_indices = @transform_5, window_bounds = array<i64: 16, 128>}]} {
    %c0 = arith.constant 0 : index
    %c0_0 = arith.constant 0 : index
    %0 = vector.load %arg1[%c0, %c0_0] : memref<16x128xf32, #tpu.memory_space<vmem>>, vector<16x128xf32>
    %c0_1 = arith.constant 0 : index
    %c0_2 = arith.constant 0 : index
    %1 = vector.load %arg2[%c0_1, %c0_2] : memref<1x128xf32, #tpu.memory_space<vmem>>, vector<1x128xf32>
    %2 = vector.broadcast %1 : vector<1x128xf32> to vector<16x128xf32>
    %3 = arith.mulf %0, %2 : vector<16x128xf32>
    %c0_3 = arith.constant 0 : index
    %c0_4 = arith.constant 0 : index
    %4 = vector.load %arg3[%c0_3, %c0_4] : memref<1x128xf32, #tpu.memory_space<vmem>>, vector<1x128xf32>
    %5 = vector.broadcast %4 : vector<1x128xf32> to vector<16x128xf32>
    %6 = arith.addf %3, %5 : vector<16x128xf32>
    %cst = arith.constant 0.000000e+00 : f32
    %7 = vector.broadcast %cst : f32 to vector<16x128xf32>
    %8 = arith.maximumf %6, %7 : vector<16x128xf32>
    %9 = arith.truncf %8 : vector<16x128xf32> to vector<16x128xbf16>
    %c0_5 = arith.constant 0 : index
    %c0_6 = arith.constant 0 : index
    %10 = vector.load %arg4[%c0_5, %c0_6] : memref<128x128xbf16, #tpu.memory_space<vmem>>, vector<128x128xbf16>
    %cst_7 = arith.constant dense<0.000000e+00> : vector<16x128xf32>
    %11 = tpu.matmul %9, %10, %cst_7 {dimension_numbers = #tpu.dot_dimension_numbers<[1], [0], [0], [1], [0, 0, 1, 1], [], []>} : vector<16x128xbf16>, vector<128x128xbf16>, vector<16x128xf32> -> vector<16x128xf32>
    %c0_8 = arith.constant 0 : index
    %c0_9 = arith.constant 0 : index
    %12 = vector.load %arg5[%c0_8, %c0_9] : memref<1x128xf32, #tpu.memory_space<vmem>>, vector<1x128xf32>
    %13 = vector.broadcast %12 : vector<1x128xf32> to vector<16x128xf32>
    %14 = arith.addf %11, %13 : vector<16x128xf32>
    %c0_10 = arith.constant 0 : index
    %c0_11 = arith.constant 0 : index
    %15 = vector.load %arg6[%c0_10, %c0_11] : memref<16x128xf32, #tpu.memory_space<vmem>>, vector<16x128xf32>
    tpu.vector_store %arg6[%c0_10, %c0_11], %14 {strides = array<i32>} : memref<16x128xf32, #tpu.memory_space<vmem>>, vector<16x128xf32>,
    return
  }
  func.func @transform_0(%arg0: i32) -> (i32, i32) {
    %c0_i32 = arith.constant 0 : i32
    %c0_i32_0 = arith.constant 0 : i32
    return %arg0, %c0_i32 : i32, i32
  }
  func.func @transform_1(%arg0: i32) -> (i32, i32) {
    %c0_i32 = arith.constant 0 : i32
    %c0_i32_0 = arith.constant 0 : i32
    %c0_i32_1 = arith.constant 0 : i32
    return %c0_i32, %c0_i32_0 : i32, i32
  }
  func.func @transform_2(%arg0: i32) -> (i32, i32) {
    %c0_i32 = arith.constant 0 : i32
    %c0_i32_0 = arith.constant 0 : i32
    %c0_i32_1 = arith.constant 0 : i32
    return %c0_i32, %c0_i32_0 : i32, i32
  }
  func.func @transform_3(%arg0: i32) -> (i32, i32) {
    %c0_i32 = arith.constant 0 : i32
    %c0_i32_0 = arith.constant 0 : i32
    %c0_i32_1 = arith.constant 0 : i32
    return %c0_i32, %c0_i32_0 : i32, i32
  }
  func.func @transform_4(%arg0: i32) -> (i32, i32) {
    %c0_i32 = arith.constant 0 : i32
    %c0_i32_0 = arith.constant 0 : i32
    %c0_i32_1 = arith.constant 0 : i32
    return %c0_i32, %c0_i32_0 : i32, i32
  }
  func.func @transform_5(%arg0: i32) -> (i32, i32) {
    %c0_i32 = arith.constant 0 : i32
    %c0_i32_0 = arith.constant 0 : i32
    return %arg0, %c0_i32 : i32, i32
  }
}

</mosaic_0001>

<llo_original>
// kernel: tpu_custom_call.1
$region0: #{tpu_custom_call.1}
  #allocation0 [shape = 'u32[]', space=smem, size = 0x4, offset = 0x4, fixed_abs, tag = 'smem constant byte address 0x4 - core index']
  #allocation1 [shape = 'u32[144,128]{1,0:T(1,128)}', space=vmem, size = 0x12000, scoped, tag = 'internal scratch']
  %s0 = inlined_call_operand.hbm [shape: f32[16,128], index: 0, kind: input, shape index: {}]
  %s1 = inlined_call_operand.vmem [shape: f32[1,128], index: 1, kind: input, shape index: {}]
  %s2 = inlined_call_operand.vmem [shape: f32[1,128], index: 2, kind: input, shape index: {}]
  %s3 = inlined_call_operand.hbm [shape: bf16[128,128], index: 3, kind: input, shape index: {}]
  %s4 = inlined_call_operand.vmem [shape: f32[1,128], index: 4, kind: input, shape index: {}]
  %s5 = inlined_call_operand.hbm [shape: f32[16,128], index: 5, kind: output, shape index: {}]
  %s6 = sld [smem:[#allocation0]]
  $region38: #{tpu_custom_call.1} parent=0
    _
  %s8 = ssub.s32 1, %s6
  %s9 = scalar_select 0, %s8, %s6
  $region1: #{tpu_custom_call.1} parent=0
    #allocation2 [shape = 'u8[8192]{0}', space=vmem, size = 0x2000, scoped, tag = 'input window, operand 0, single buffered']
    #allocation3 [shape = 's32[1]{0}', space=sflag, size = 0x4, scoped, tag = 'scoped memory for tpu_custom_call.1']
    #allocation4 [shape = 's32[1]{0}', space=sflag, size = 0x4, scoped, tag = 'scoped memory for tpu_custom_call.1']
    #allocation5 [shape = 'u8[32768]{0}', space=vmem, size = 0x8000, scoped, tag = 'input window, operand 3, single buffered']
    #allocation6 [shape = 's32[1]{0}', space=sflag, size = 0x4, scoped, tag = 'scoped memory for tpu_custom_call.1']
    #allocation7 [shape = 'u8[8192]{0}', space=vmem, size = 0x2000, scoped, tag = 'output window, operand 0, single buffered']
    %10 = vsyncpa [#allocation3], 0
    %11 = vsyncpa [#allocation6], 0
    %12 = vsyncpa [#allocation4], 0
    // Predicated region
    $region2: #{tpu_custom_call.1} parent=1 // pred_check
      _
    $region3: #{tpu_custom_call.1} parent=1 // pred_check_branch
      %14 = sbr.rel (0) target = $region5
    $region4: #{tpu_custom_call.1} parent=1 // pred_region
      %s16 = ssub.s32 256, 256
      %17 = vsyncadd [#allocation3], %s16
      %s18 = sshll.u32 [#allocation2], 4
      %s19 = int_to_ptr.vmem [resolvable:$true] %s18
      %24 = dma.hbm_to_vmem [thread:$0]  %s0, 256, %s19, [#allocation3], 128, 128, 8
    $region5: #{tpu_custom_call.1} parent=1 // pred_fallthru
      _
    // Predicated region
    $region6: #{tpu_custom_call.1} parent=1 // pred_check
      _
    $region7: #{tpu_custom_call.1} parent=1 // pred_check_branch
      %26 = sbr.rel (0) target = $region9
    $region8: #{tpu_custom_call.1} parent=1 // pred_region
      _
    $region9: #{tpu_custom_call.1} parent=1 // pred_fallthru
      _
    // Predicated region
    $region10: #{tpu_custom_call.1} parent=1 // pred_check
      _
    $region11: #{tpu_custom_call.1} parent=1 // pred_check_branch
      %28 = sbr.rel (0) target = $region13
    $region12: #{tpu_custom_call.1} parent=1 // pred_region
      _
    $region13: #{tpu_custom_call.1} parent=1 // pred_fallthru
      _
    // Predicated region
    $region14: #{tpu_custom_call.1} parent=1 // pred_check
      _
    $region15: #{tpu_custom_call.1} parent=1 // pred_check_branch
      %30 = sbr.rel (0) target = $region17
    $region16: #{tpu_custom_call.1} parent=1 // pred_region
      %s32 = ssub.s32 1024, 1024
      %33 = vsyncadd [#allocation6], %s32
      %s34 = sshll.u32 [#allocation5], 4
      %s35 = int_to_ptr.vmem [resolvable:$true] %s34
      %40 = dma.hbm_to_vmem [thread:$0]  %s3, 1024, %s35, [#allocation6], 64, 64, 4
    $region17: #{tpu_custom_call.1} parent=1 // pred_fallthru
      _
    // Predicated region
    $region18: #{tpu_custom_call.1} parent=1 // pred_check
      _
    $region19: #{tpu_custom_call.1} parent=1 // pred_check_branch
      %42 = sbr.rel (0) target = $region21
    $region20: #{tpu_custom_call.1} parent=1 // pred_region
      _
    $region21: #{tpu_custom_call.1} parent=1 // pred_fallthru
      _
    // Predicated region
    $region22: #{tpu_custom_call.1} parent=1 // pred_check
      _
    $region23: #{tpu_custom_call.1} parent=1 // pred_check_branch
      %44 = sbr.rel (0) target = $region25
    $region24: #{tpu_custom_call.1} parent=1 // pred_region
      %45 = dma.done [#allocation3], 256
    $region25: #{tpu_custom_call.1} parent=1 // pred_fallthru
      _
    // Predicated region
    $region26: #{tpu_custom_call.1} parent=1 // pred_check
      _
    $region27: #{tpu_custom_call.1} parent=1 // pred_check_branch
      %47 = sbr.rel (0) target = $region29
    $region28: #{tpu_custom_call.1} parent=1 // pred_region
      %48 = dma.done [#allocation6], 1024
    $region29: #{tpu_custom_call.1} parent=1 // pred_fallthru
      _
    %v50 = vld [vmem:[#allocation2] sm:$0xff]
    %v51 = vld [vmem:[#allocation2 + $0x8] sm:$0xff]
    %v52 = vld [vmem:[%s1] sm:$0x1]
    %v54 = vlaneseq
    %v55 = vshrl.u32 %v54, 7
    %v56 = vsub.s32 0, %v55
    %v57 = vrot.slane %v52, %v56
    %v59 = vmul.f32 %v50, %v57
    %v60 = vmul.f32 %v51, %v57
    %v61 = vld [vmem:[%s2] sm:$0x1]
    %v63 = vlaneseq
    %v64 = vshrl.u32 %v63, 7
    %v65 = vsub.s32 0, %v64
    %v66 = vrot.slane %v61, %v65
    %v68 = vadd.f32 %v59, %v66
    %v69 = vadd.f32 %v60, %v66
    %v70 = vmax.f32 %v68, 0.0
    %v71 = vmax.f32 %v69, 0.0
    %v72 = vpack.c.bf16 %v71, %v70
    %v73 = vld [vmem:[#allocation5] sm:$0xf]
    %v74 = vld [vmem:[#allocation5 + $0x4] sm:$0xf]
    %v75 = vld [vmem:[#allocation5 + $0x8] sm:$0xf]
    %v76 = vld [vmem:[#allocation5 + $0xc] sm:$0xf]
    %v77 = vld [vmem:[#allocation5 + $0x10] sm:$0xf]
    %v78 = vld [vmem:[#allocation5 + $0x14] sm:$0xf]
    %v79 = vld [vmem:[#allocation5 + $0x18] sm:$0xf]
    %v80 = vld [vmem:[#allocation5 + $0x1c] sm:$0xf]
    %v81 = vld [vmem:[#allocation5 + $0x20] sm:$0xf]
    %v82 = vld [vmem:[#allocation5 + $0x24] sm:$0xf]
    %v83 = vld [vmem:[#allocation5 + $0x28] sm:$0xf]
    %v84 = vld [vmem:[#allocation5 + $0x2c] sm:$0xf]
    %v85 = vld [vmem:[#allocation5 + $0x30] sm:$0xf]
    %v86 = vld [vmem:[#allocation5 + $0x34] sm:$0xf]
    %v87 = vld [vmem:[#allocation5 + $0x38] sm:$0xf]
    %v88 = vld [vmem:[#allocation5 + $0x3c] sm:$0xf]
    %v89 = vld [vmem:[%s4] sm:$0x1]
    %v91 = vlaneseq
    %v92 = vshrl.u32 %v91, 7
    %v93 = vsub.s32 0, %v92
    %v94 = vrot.slane %v89, %v93
    %v112 = vunpack.c.l.b16 %v73
    %v113 = vunpack.c.l.b16 %v74
    %v114 = vunpack.c.l.b16 %v75
    %v115 = vunpack.c.l.b16 %v76
    %v116 = vunpack.c.l.b16 %v77
    %v117 = vunpack.c.l.b16 %v78
    %v118 = vunpack.c.l.b16 %v79
    %v119 = vunpack.c.l.b16 %v80
    %v120 = vunpack.c.l.b16 %v81
    %v121 = vunpack.c.l.b16 %v82
    %v122 = vunpack.c.l.b16 %v83
    %v123 = vunpack.c.l.b16 %v84
    %v124 = vunpack.c.l.b16 %v85
    %v125 = vunpack.c.l.b16 %v86
    %v126 = vunpack.c.l.b16 %v87
    %v127 = vunpack.c.l.b16 %v88
    %v128 = vpack.c.b16 %v113, %v112
    %v129 = vpack.c.b16 %v115, %v114
    %v130 = vpack.c.b16 %v117, %v116
    %v131 = vpack.c.b16 %v119, %v118
    %v132 = vpack.c.b16 %v121, %v120
    %v133 = vpack.c.b16 %v123, %v122
    %v134 = vpack.c.b16 %v125, %v124
    %v135 = vpack.c.b16 %v127, %v126
    %144 = vmatprep.subr.bf16.mxu0 0
    %145 = vmatpush1.bf16.msra.mxu0 %v128
    %146 = vmatprep.subr.bf16.mxu0 0
    %147 = vmatpush1.bf16.msra.mxu0 %v129
    %148 = vmatprep.subr.bf16.mxu0 0
    %149 = vmatpush1.bf16.msra.mxu0 %v130
    %150 = vmatprep.subr.bf16.mxu0 0
    %151 = vmatpush1.bf16.msra.mxu0 %v131
    %152 = vmatprep.subr.bf16.mxu0 0
    %153 = vmatpush1.bf16.msra.mxu0 %v132
    %154 = vmatprep.subr.bf16.mxu0 0
    %155 = vmatpush1.bf16.msra.mxu0 %v133
    %156 = vmatprep.subr.bf16.mxu0 0
    %157 = vmatpush1.bf16.msra.mxu0 %v134
    %158 = vmatprep.subr.bf16.mxu0 0
    %159 = vmatpush1.bf16.msra.mxu0 %v135
    %160 = vmatprep.subr.bf16.mxu0 0
    %161 = vmatpush1.bf16.msra.mxu0 0
    %162 = vmatprep.subr.bf16.mxu0 0
    %163 = vmatpush1.bf16.msra.mxu0 0
    %164 = vmatprep.subr.bf16.mxu0 0
    %165 = vmatpush1.bf16.msra.mxu0 0
    %166 = vmatprep.subr.bf16.mxu0 0
    %167 = vmatpush1.bf16.msra.mxu0 0
    %168 = vmatprep.subr.bf16.mxu0 0
    %169 = vmatpush1.bf16.msra.mxu0 0
    %170 = vmatprep.subr.bf16.mxu0 0
    %171 = vmatpush1.bf16.msra.mxu0 0
    %172 = vmatprep.subr.bf16.mxu0 0
    %173 = vmatpush1.bf16.msra.mxu0 0
    %174 = vmatprep.subr.bf16.mxu0 0
    %175 = vmatpush1.bf16.msra.mxu0 0
    %176 = vmatprep.mubr.bf16.mxu0 0
    %177 = vmatmul.mubr.bf16.gmra.mrb[0].mxu0 %v72
    %v178 = vpop.f32.mrb[0].mxu0
    %v179 = vadd.f32 %v94, %v178
    %v180 = vpop.f32.mrb[0].mxu0
    %v181 = vpop.f32.mrb[0].mxu0
    %v182 = vadd.f32 %v94, %v181
    %v183 = vpop.f32.mrb[0].mxu0
    %184 = vdwg.mxu0
    %185 = vst [vmem:[#allocation7] sm:$0xff] %v179
    %186 = vst [vmem:[#allocation7 + $0x8] sm:$0xff] %v182
    // Predicated region
    $region30: #{tpu_custom_call.1} parent=1 // pred_check
      _
    $region31: #{tpu_custom_call.1} parent=1 // pred_check_branch
      %188 = sbr.rel (0) target = $region33
    $region32: #{tpu_custom_call.1} parent=1 // pred_region
      %s190 = ssub.s32 256, 256
      %191 = vsyncadd [#allocation4], %s190
      %s192 = sshll.u32 [#allocation7], 4
      %s193 = int_to_ptr.vmem [resolvable:$true] %s192
      %198 = dma.vmem_to_hbm [thread:$0]  %s193, 256, %s5, [#allocation4], 128, 128, 8
    $region33: #{tpu_custom_call.1} parent=1 // pred_fallthru
      _
    // Predicated region
    $region34: #{tpu_custom_call.1} parent=1 // pred_check
      _
    $region35: #{tpu_custom_call.1} parent=1 // pred_check_branch
      %200 = sbr.rel (0) target = $region37
    $region36: #{tpu_custom_call.1} parent=1 // pred_region
      %201 = dma.done [#allocation4], 256
    $region37: #{tpu_custom_call.1} parent=1 // pred_fallthru
      _
    %202 = vsyncpa [#allocation3], 1
    %203 = vsyncpa [#allocation6], 1
    %204 = vsyncpa [#allocation4], 1

</llo_original>
